<compile_context>
chip_gen: v6e
topology: v6e:2x2x1
jax: 0.10.0
libtpu: 0.0.40
codegen_flags: <defaults>
</compile_context>

<pallas_src>
import jax
import jax.numpy as jnp
from jax.experimental import pallas as pl
from jax.experimental.pallas import tpu as pltpu


def _time_mlp_kernel(t_ref, w1_ref, b1_ref, w2_ref, b2_ref, out_ref):
    # Linear 1: (TM, in_dim) @ (in_dim, hidden) + (1, hidden)  -> MXU, f32 acc.
    h = jnp.dot(t_ref[...], w1_ref[...], preferred_element_type=jnp.float32)
    h = h + b1_ref[...]
    # SiLU in f32: sigmoid goes to the EUP (free slot), mul to the VPU.
    h = h * jax.nn.sigmoid(h)
    # Linear 2: (TM, hidden) @ (hidden, out_dim) + (1, out_dim) -> MXU, f32 acc.
    if h.dtype != w2_ref.dtype:  # only cast if dtypes actually differ
        h = h.astype(w2_ref.dtype)
    out = jnp.dot(h, w2_ref[...], preferred_element_type=jnp.float32)
    out_ref[...] = (out + b2_ref[...]).astype(out_ref.dtype)


def time_mlp(t, w1, b1, w2, b2, *, block_b=256):
    """t: (B, in_dim); w1: (in_dim, hidden); b1: (hidden,);
       w2: (hidden, out_dim); b2: (out_dim,). Returns (B, out_dim)."""
    B, in_dim = t.shape
    hidden = w1.shape[1]
    out_dim = w2.shape[1]

    # Biases as (1, dim) rows so they broadcast over the batch tile in-kernel.
    b1_2d = b1.reshape(1, hidden)
    b2_2d = b2.reshape(1, out_dim)

    if B <= block_b:
        # Gridless path: every operand is a single whole-array VMEM block.
        return pl.pallas_call(
            _time_mlp_kernel,
            out_shape=jax.ShapeDtypeStruct((B, out_dim), t.dtype),
            in_specs=[pl.BlockSpec(memory_space=pltpu.MemorySpace.VMEM)] * 5,
            out_specs=pl.BlockSpec(memory_space=pltpu.MemorySpace.VMEM),
        )(t, w1, b1_2d, w2, b2_2d)

    # Batched path: tile only the batch axis; weights/biases stay VMEM-resident
    # across grid steps (constant index_maps). TM is a multiple of 8 (f32
    # sublane); Pallas masks the partial last block automatically.
    tm = block_b
    grid = (pl.cdiv(B, tm),)
    return pl.pallas_call(
        _time_mlp_kernel,
        out_shape=jax.ShapeDtypeStruct((B, out_dim), t.dtype),
        grid=grid,
        in_specs=[
            pl.BlockSpec((tm, in_dim), lambda i: (i, 0)),       # activations: tiled
            pl.BlockSpec((in_dim, hidden), lambda i: (0, 0)),   # w1: resident
            pl.BlockSpec((1, hidden), lambda i: (0, 0)),        # b1: resident
            pl.BlockSpec((hidden, out_dim), lambda i: (0, 0)),  # w2: resident
            pl.BlockSpec((1, out_dim), lambda i: (0, 0)),       # b2: resident
        ],
        out_specs=pl.BlockSpec((tm, out_dim), lambda i: (i, 0)),
        compiler_params=pltpu.CompilerParams(
            dimension_semantics=("parallel",)),  # v7x: both TCs split the rows
    )(t, w1, b1_2d, w2, b2_2d)


def time_mlp_ref(t, w1, b1, w2, b2):
    """Pure-JAX reference (mirrors PyTorch forward: Linear -> SiLU -> Linear)."""
    h = t @ w1 + b1
    h = h * jax.nn.sigmoid(h)
    return h @ w2 + b2


if __name__ == "__main__":
    # Small shapes implied by the module: in_dim=16, hidden=32, out_dim=16.
    in_dim, hidden_dim, out_dim = 16, 32, 16

    key = jax.random.PRNGKey(0)
    k_t, k_w1, k_b1, k_w2, k_b2, k_tb = jax.random.split(key, 6)

    # Deterministic synthetic parameters (uniform, nn.Linear-like scale).
    w1 = jax.random.uniform(k_w1, (in_dim, hidden_dim), dtype=jnp.float32,
                            minval=-1.0, maxval=1.0) / jnp.sqrt(in_dim)
    b1 = jax.random.uniform(k_b1, (hidden_dim,), dtype=jnp.float32,
                            minval=-1.0, maxval=1.0) / jnp.sqrt(in_dim)
    w2 = jax.random.uniform(k_w2, (hidden_dim, out_dim), dtype=jnp.float32,
                            minval=-1.0, maxval=1.0) / jnp.sqrt(hidden_dim)
    b2 = jax.random.uniform(k_b2, (out_dim,), dtype=jnp.float32,
                            minval=-1.0, maxval=1.0) / jnp.sqrt(hidden_dim)

    # --- Path 1: small batch (gridless, whole arrays in VMEM) ---
    B_small = 8
    t_small = jax.random.normal(k_t, (B_small, in_dim), dtype=jnp.float32)
    out_small = jax.block_until_ready(time_mlp(t_small, w1, b1, w2, b2))
    ref_small = time_mlp_ref(t_small, w1, b1, w2, b2)
    assert out_small.shape == (B_small, out_dim)
    assert jnp.allclose(out_small, ref_small, atol=1e-5, rtol=1e-5), \
        "small-batch mismatch vs reference"

    # --- Path 2: batched timesteps (tiled batch axis, weights VMEM-resident) ---
    B_big = 512
    t_big = jax.random.normal(k_tb, (B_big, in_dim), dtype=jnp.float32)
    out_big = jax.block_until_ready(time_mlp(t_big, w1, b1, w2, b2, block_b=256))
    ref_big = time_mlp_ref(t_big, w1, b1, w2, b2)
    assert out_big.shape == (B_big, out_dim)
    assert jnp.allclose(out_big, ref_big, atol=1e-5, rtol=1e-5), \
        "batched mismatch vs reference"

    print("KERNEL_OK")
</pallas_src>

<mosaic_0001>
module attributes {stable_mosaic.version = 11 : i64} {
  func.func @_time_mlp_kernel(%arg0: memref<8x16xf32, #tpu.memory_space<vmem>>, %arg1: memref<16x32xf32, #tpu.memory_space<vmem>>, %arg2: memref<1x32xf32, #tpu.memory_space<vmem>>, %arg3: memref<32x16xf32, #tpu.memory_space<vmem>>, %arg4: memref<1x16xf32, #tpu.memory_space<vmem>>, %arg5: memref<8x16xf32, #tpu.memory_space<vmem>>) attributes {dimension_semantics = [], scalar_prefetch = 0 : i64, scratch_operands = 0 : i64, tpu.core_type = #tpu.core_type<tc>} {
    %c0 = arith.constant 0 : index
    %c0_0 = arith.constant 0 : index
    %0 = vector.load %arg0[%c0, %c0_0] : memref<8x16xf32, #tpu.memory_space<vmem>>, vector<8x16xf32>
    %c0_1 = arith.constant 0 : index
    %c0_2 = arith.constant 0 : index
    %1 = vector.load %arg1[%c0_1, %c0_2] : memref<16x32xf32, #tpu.memory_space<vmem>>, vector<16x32xf32>
    %cst = arith.constant dense<0.000000e+00> : vector<8x32xf32>
    %2 = tpu.matmul %0, %1, %cst {dimension_numbers = #tpu.dot_dimension_numbers<[1], [0], [0], [1], [0, 0, 1, 1], [], []>} : vector<8x16xf32>, vector<16x32xf32>, vector<8x32xf32> -> vector<8x32xf32>
    %c0_3 = arith.constant 0 : index
    %c0_4 = arith.constant 0 : index
    %3 = vector.load %arg2[%c0_3, %c0_4] : memref<1x32xf32, #tpu.memory_space<vmem>>, vector<1x32xf32>
    %4 = vector.broadcast %3 : vector<1x32xf32> to vector<8x32xf32>
    %5 = arith.addf %2, %4 : vector<8x32xf32>
    %6 = arith.negf %5 : vector<8x32xf32>
    %7 = math.exp %6 : vector<8x32xf32>
    %cst_5 = arith.constant 1.000000e+00 : f32
    %8 = vector.broadcast %cst_5 : f32 to vector<8x32xf32>
    %9 = arith.addf %8, %7 : vector<8x32xf32>
    %10 = arith.divf %8, %9 : vector<8x32xf32>
    %11 = arith.mulf %5, %10 : vector<8x32xf32>
    %c0_6 = arith.constant 0 : index
    %c0_7 = arith.constant 0 : index
    %12 = vector.load %arg3[%c0_6, %c0_7] : memref<32x16xf32, #tpu.memory_space<vmem>>, vector<32x16xf32>
    %cst_8 = arith.constant dense<0.000000e+00> : vector<8x16xf32>
    %13 = tpu.matmul %11, %12, %cst_8 {dimension_numbers = #tpu.dot_dimension_numbers<[1], [0], [0], [1], [0, 0, 1, 1], [], []>} : vector<8x32xf32>, vector<32x16xf32>, vector<8x16xf32> -> vector<8x16xf32>
    %c0_9 = arith.constant 0 : index
    %c0_10 = arith.constant 0 : index
    %14 = vector.load %arg4[%c0_9, %c0_10] : memref<1x16xf32, #tpu.memory_space<vmem>>, vector<1x16xf32>
    %15 = vector.broadcast %14 : vector<1x16xf32> to vector<8x16xf32>
    %16 = arith.addf %13, %15 : vector<8x16xf32>
    %c0_11 = arith.constant 0 : index
    %c0_12 = arith.constant 0 : index
    %17 = vector.load %arg5[%c0_11, %c0_12] : memref<8x16xf32, #tpu.memory_space<vmem>>, vector<8x16xf32>
    tpu.vector_store %arg5[%c0_11, %c0_12], %16 {strides = array<i32>} : memref<8x16xf32, #tpu.memory_space<vmem>>, vector<8x16xf32>,
    return
  }
}

</mosaic_0001>

<llo_original>
// kernel: tpu_custom_call.1
$region0: #{tpu_custom_call.1}
  #allocation0 [shape = 'u32[]', space=smem, size = 0x4, offset = 0x4, fixed_abs, tag = 'smem constant byte address 0x4 - core index']
  #allocation1 [shape = 'u32[144,128]{1,0:T(1,128)}', space=vmem, size = 0x12000, scoped, tag = 'internal scratch']
  %s0 = inlined_call_operand.vmem [shape: f32[8,16], index: 0, kind: input, shape index: {}]
  %s1 = inlined_call_operand.vmem [shape: f32[16,32], index: 1, kind: input, shape index: {}]
  %s2 = inlined_call_operand.vmem [shape: f32[1,32], index: 2, kind: input, shape index: {}]
  %s3 = inlined_call_operand.vmem [shape: f32[32,16], index: 3, kind: input, shape index: {}]
  %s4 = inlined_call_operand.vmem [shape: f32[1,16], index: 4, kind: input, shape index: {}]
  %s5 = inlined_call_operand.hbm [shape: f32[8,16], index: 5, kind: output, shape index: {}]
  %s6 = sld [smem:[#allocation0]]
  $region30: #{tpu_custom_call.1} parent=0
    _
  %s8 = ssub.s32 1, %s6
  %s9 = scalar_select 0, %s8, %s6
  $region1: #{tpu_custom_call.1} parent=0
    #allocation2 [shape = 'u8[4096]{0}', space=vmem, size = 0x1000, scoped, tag = 'output window, operand 0, single buffered']
    #allocation3 [shape = 's32[1]{0}', space=sflag, size = 0x4, scoped, tag = 'scoped memory for tpu_custom_call.1']
    %10 = vsyncpa [#allocation3], 0
    // Predicated region
    $region2: #{tpu_custom_call.1} parent=1 // pred_check
      _
    $region3: #{tpu_custom_call.1} parent=1 // pred_check_branch
      %12 = sbr.rel (0) target = $region5
    $region4: #{tpu_custom_call.1} parent=1 // pred_region
      _
    $region5: #{tpu_custom_call.1} parent=1 // pred_fallthru
      _
    // Predicated region
    $region6: #{tpu_custom_call.1} parent=1 // pred_check
      _
    $region7: #{tpu_custom_call.1} parent=1 // pred_check_branch
      %14 = sbr.rel (0) target = $region9
    $region8: #{tpu_custom_call.1} parent=1 // pred_region
      _
    $region9: #{tpu_custom_call.1} parent=1 // pred_fallthru
      _
    // Predicated region
    $region10: #{tpu_custom_call.1} parent=1 // pred_check
      _
    $region11: #{tpu_custom_call.1} parent=1 // pred_check_branch
      %16 = sbr.rel (0) target = $region13
    $region12: #{tpu_custom_call.1} parent=1 // pred_region
      _
    $region13: #{tpu_custom_call.1} parent=1 // pred_fallthru
      _
    // Predicated region
    $region14: #{tpu_custom_call.1} parent=1 // pred_check
      _
    $region15: #{tpu_custom_call.1} parent=1 // pred_check_branch
      %18 = sbr.rel (0) target = $region17
    $region16: #{tpu_custom_call.1} parent=1 // pred_region
      _
    $region17: #{tpu_custom_call.1} parent=1 // pred_fallthru
      _
    // Predicated region
    $region18: #{tpu_custom_call.1} parent=1 // pred_check
      _
    $region19: #{tpu_custom_call.1} parent=1 // pred_check_branch
      %20 = sbr.rel (0) target = $region21
    $region20: #{tpu_custom_call.1} parent=1 // pred_region
      _
    $region21: #{tpu_custom_call.1} parent=1 // pred_fallthru
      _
    %v21 = vld [vmem:[%s0] sm:$0xff]
    %v22 = vld [vmem:[%s1] sm:$0xff]
    %v23 = vld [vmem:[%s1 + $0x8] sm:$0xff]
    %v24 = vld [vmem:[%s2] sm:$0x1]
    %v26 = vlaneseq
    %v27 = vshrl.u32 %v26, 7
    %v28 = vsub.s32 0, %v27
    %v29 = vrot.slane %v24, %v28
    %vm31 = vcmask 130048
    %v33 = vsel %vm31, %v21, 0
    %35 = vmatprep.subr.mxu0 0.0
    %36 = vmatpush1.msra.mxu0 0.0
    %37 = vmatprep.subr.mxu0 0.0
    %38 = vmatpush1.msra.mxu0 0.0
    %39 = vmatprep.subr.mxu0 0.0
    %40 = vmatpush1.msra.mxu0 0.0
    %41 = vmatprep.subr.mxu0 0.0
    %42 = vmatpush1.msra.mxu0 0.0
    %43 = vmatprep.subr.mxu0 0.0
    %44 = vmatpush1.msra.mxu0 0.0
    %45 = vmatprep.subr.mxu0 0.0
    %46 = vmatpush1.msra.mxu0 0.0
    %47 = vmatprep.subr.mxu0 0.0
    %48 = vmatpush1.msra.mxu0 0.0
    %49 = vmatprep.subr.mxu0 0.0
    %50 = vmatpush1.msra.mxu0 0.0
    %51 = vmatprep.subr.mxu0 0.0
    %52 = vmatpush1.msra.mxu0 0.0
    %53 = vmatprep.subr.mxu0 0.0
    %54 = vmatpush1.msra.mxu0 0.0
    %55 = vmatprep.subr.mxu0 0.0
    %56 = vmatpush1.msra.mxu0 0.0
    %57 = vmatprep.subr.mxu0 0.0
    %58 = vmatpush1.msra.mxu0 0.0
    %59 = vmatprep.subr.mxu0 0.0
    %60 = vmatpush1.msra.mxu0 0.0
    %61 = vmatprep.subr.mxu0 0.0
    %62 = vmatpush1.msra.mxu0 0.0
    %63 = vmatprep.subr.mxu0 0.0
    %64 = vmatpush1.msra.mxu0 %v23
    %65 = vmatprep.subr.mxu0 0.0
    %66 = vmatpush1.msra.mxu0 %v22
    %67 = vmatprep.subr.mxu0 0.0
    %68 = vmatpush2.msra.mxu0 0.0
    %69 = vmatprep.subr.mxu0 0.0
    %70 = vmatpush2.msra.mxu0 0.0
    %71 = vmatprep.subr.mxu0 0.0
    %72 = vmatpush2.msra.mxu0 0.0
    %73 = vmatprep.subr.mxu0 0.0
    %74 = vmatpush2.msra.mxu0 0.0
    %75 = vmatprep.subr.mxu0 0.0
    %76 = vmatpush2.msra.mxu0 0.0
    %77 = vmatprep.subr.mxu0 0.0
    %78 = vmatpush2.msra.mxu0 0.0
    %79 = vmatprep.subr.mxu0 0.0
    %80 = vmatpush2.msra.mxu0 0.0
    %81 = vmatprep.subr.mxu0 0.0
    %82 = vmatpush2.msra.mxu0 0.0
    %83 = vmatprep.subr.mxu0 0.0
    %84 = vmatpush2.msra.mxu0 0.0
    %85 = vmatprep.subr.mxu0 0.0
    %86 = vmatpush2.msra.mxu0 0.0
    %87 = vmatprep.subr.mxu0 0.0
    %88 = vmatpush2.msra.mxu0 0.0
    %89 = vmatprep.subr.mxu0 0.0
    %90 = vmatpush2.msra.mxu0 0.0
    %91 = vmatprep.subr.mxu0 0.0
    %92 = vmatpush2.msra.mxu0 0.0
    %93 = vmatprep.subr.mxu0 0.0
    %94 = vmatpush2.msra.mxu0 0.0
    %95 = vmatprep.subr.mxu0 0.0
    %96 = vmatpush2.msra.mxu0 0.0
    %97 = vmatprep.subr.mxu0 0.0
    %98 = vmatpush2.msra.mxu0 0.0
    %99 = vmatprep.mubr.f32.mxu0 0.0
    %100 = vmatmul.mubr.f32.gmra.mxu0 %v33
    %v101 = vpop.f32.mrf.mxu0
    %v102 = vadd.f32 %v29, %v101
    %v103 = vpop.f32.mrf.mxu0
    %104 = vdwg.mxu0
    %v105 = vxor.u32 %v102, 2147483648
    %v106 = vmul.f32 %v105, 1.442695
    %v107 = vpow.pop %v106
    %v108 = vadd.f32 %v107, 1.0
    %v109 = vrcp.pop %v108
    %v110 = vmul.f32 1.0, %v109
    %v111 = vmul.f32 %v102, %v110
    %v112 = vld [vmem:[%s3] sm:$0xff]
    %v113 = vld [vmem:[%s3 + $0x8] sm:$0xff]
    %v114 = vld [vmem:[%s3 + $0x10] sm:$0xff]
    %v115 = vld [vmem:[%s3 + $0x18] sm:$0xff]
    %v116 = vld [vmem:[%s4] sm:$0x1]
    %v118 = vlaneseq
    %v119 = vshrl.u32 %v118, 7
    %v120 = vsub.s32 0, %v119
    %v121 = vrot.slane %v116, %v120
    %vm123 = vcmask 261120
    %v125 = vsel %vm123, %v111, 0
    %127 = vmatprep.subr.mxu0 0.0
    %128 = vmatpush1.msra.mxu0 0.0
    %129 = vmatprep.subr.mxu0 0.0
    %130 = vmatpush1.msra.mxu0 0.0
    %131 = vmatprep.subr.mxu0 0.0
    %132 = vmatpush1.msra.mxu0 0.0
    %133 = vmatprep.subr.mxu0 0.0
    %134 = vmatpush1.msra.mxu0 0.0
    %135 = vmatprep.subr.mxu0 0.0
    %136 = vmatpush1.msra.mxu0 0.0
    %137 = vmatprep.subr.mxu0 0.0
    %138 = vmatpush1.msra.mxu0 0.0
    %139 = vmatprep.subr.mxu0 0.0
    %140 = vmatpush1.msra.mxu0 0.0
    %141 = vmatprep.subr.mxu0 0.0
    %142 = vmatpush1.msra.mxu0 0.0
    %143 = vmatprep.subr.mxu0 0.0
    %144 = vmatpush1.msra.mxu0 0.0
    %145 = vmatprep.subr.mxu0 0.0
    %146 = vmatpush1.msra.mxu0 0.0
    %147 = vmatprep.subr.mxu0 0.0
    %148 = vmatpush1.msra.mxu0 0.0
    %149 = vmatprep.subr.mxu0 0.0
    %150 = vmatpush1.msra.mxu0 0.0
    %151 = vmatprep.subr.mxu0 0.0
    %152 = vmatpush1.msra.mxu0 %v115
    %153 = vmatprep.subr.mxu0 0.0
    %154 = vmatpush1.msra.mxu0 %v114
    %155 = vmatprep.subr.mxu0 0.0
    %156 = vmatpush1.msra.mxu0 %v113
    %157 = vmatprep.subr.mxu0 0.0
    %158 = vmatpush1.msra.mxu0 %v112
    %159 = vmatprep.subr.mxu0 0.0
    %160 = vmatpush2.msra.mxu0 0.0
    %161 = vmatprep.subr.mxu0 0.0
    %162 = vmatpush2.msra.mxu0 0.0
    %163 = vmatprep.subr.mxu0 0.0
    %164 = vmatpush2.msra.mxu0 0.0
    %165 = vmatprep.subr.mxu0 0.0
    %166 = vmatpush2.msra.mxu0 0.0
    %167 = vmatprep.subr.mxu0 0.0
    %168 = vmatpush2.msra.mxu0 0.0
    %169 = vmatprep.subr.mxu0 0.0
    %170 = vmatpush2.msra.mxu0 0.0
    %171 = vmatprep.subr.mxu0 0.0
    %172 = vmatpush2.msra.mxu0 0.0
    %173 = vmatprep.subr.mxu0 0.0
    %174 = vmatpush2.msra.mxu0 0.0
    %175 = vmatprep.subr.mxu0 0.0
    %176 = vmatpush2.msra.mxu0 0.0
    %177 = vmatprep.subr.mxu0 0.0
    %178 = vmatpush2.msra.mxu0 0.0
    %179 = vmatprep.subr.mxu0 0.0
    %180 = vmatpush2.msra.mxu0 0.0
    %181 = vmatprep.subr.mxu0 0.0
    %182 = vmatpush2.msra.mxu0 0.0
    %183 = vmatprep.subr.mxu0 0.0
    %184 = vmatpush2.msra.mxu0 0.0
    %185 = vmatprep.subr.mxu0 0.0
    %186 = vmatpush2.msra.mxu0 0.0
    %187 = vmatprep.subr.mxu0 0.0
    %188 = vmatpush2.msra.mxu0 0.0
    %189 = vmatprep.subr.mxu0 0.0
    %190 = vmatpush2.msra.mxu0 0.0
    %191 = vmatprep.mubr.f32.mxu0 0.0
    %192 = vmatmul.mubr.f32.gmra.mxu0 %v125
    %v193 = vpop.f32.mrf.mxu0
    %v194 = vadd.f32 %v121, %v193
    %v195 = vpop.f32.mrf.mxu0
    %196 = vdwg.mxu0
    %197 = vst.msk [vmem:[#allocation2] sm:$0xff] %vm31, %v194
    // Predicated region
    $region22: #{tpu_custom_call.1} parent=1 // pred_check
      _
    $region23: #{tpu_custom_call.1} parent=1 // pred_check_branch
      %199 = sbr.rel (0) target = $region25
    $region24: #{tpu_custom_call.1} parent=1 // pred_region
      %s201 = ssub.s32 128, 128
      %202 = vsyncadd [#allocation3], %s201
      %s204 = sshll.u32 [#allocation2], 4
      %s205 = int_to_ptr.vmem [resolvable:$true] %s204
      %207 = dma.vmem_to_hbm [thread:$0]  %s205, 128, %s5, [#allocation3]
    $region25: #{tpu_custom_call.1} parent=1 // pred_fallthru
      _
    // Predicated region
    $region26: #{tpu_custom_call.1} parent=1 // pred_check
      _
    $region27: #{tpu_custom_call.1} parent=1 // pred_check_branch
      %209 = sbr.rel (0) target = $region29
    $region28: #{tpu_custom_call.1} parent=1 // pred_region
      %210 = dma.done [#allocation3], 128
    $region29: #{tpu_custom_call.1} parent=1 // pred_fallthru
      _
    %211 = vsyncpa [#allocation3], 1

</llo_original>
